<compile_context>
chip_gen: v6e
topology: v6e:2x2x1
jax: 0.10.0
libtpu: 0.0.40
codegen_flags: <defaults>
</compile_context>

<pallas_src>
import math

import jax
import jax.numpy as jnp
from jax.experimental import pallas as pl
from jax.experimental.pallas import tpu as pltpu


def _prelu_kernel(x_ref, a_ref, o_ref):
    x = x_ref[...]                       # (TB, TH), x dtype
    a = a_ref[...]                       # (1, TH),  x dtype, broadcasts over rows
    o_ref[...] = jnp.where(x > 0, x, a * x)   # 1 vld + ~3 VALU + 1 vst per vreg


def _cdiv(a, b):
    return -(-a // b)


def _round_up(v, m):
    return ((v + m - 1) // m) * m


# ~4 MiB blocks: per-step overhead (~0.35 us) stays tiny vs. per-step DMA,
# and 2 arrays x 2 buffers x 4 MiB = 16 MiB fits every generation comfortably.
_BLOCK_BUDGET_BYTES = 4 * 1024 * 1024
_MIN_GRID_STEPS = 4          # >= 2 for pipelining, >= 4 so v7x's 2 TCs both get work


def _choose_tiles(B, H, itemsize):
    """Pick (tb, th): row tile a multiple of the sublane pack (or == B), column
    tile a multiple of 128 (or == H).  Min-grid-steps takes precedence over
    maximizing the block size."""
    pack = max(8, 32 // itemsize)        # f32: 8, bf16: 16, int8: 32 sublane packing

    # Column tile: full H if a single pack-row stripe fits the budget,
    # otherwise a budget-sized multiple of 128 (robust for very wide H).
    if H * pack * itemsize <= _BLOCK_BUDGET_BYTES:
        th = H
    else:
        th = max(128, (_BLOCK_BUDGET_BYTES // (pack * itemsize)) // 128 * 128)
        th = min(th, H)

    # Row tile: largest multiple of `pack` keeping one block ~= budget.
    tb = max(pack, (_BLOCK_BUDGET_BYTES // (th * itemsize)) // pack * pack)
    tb = min(tb, B)                      # tb >= B means "full dim" => always legal

    # Minimum-grid-steps rule: shrink tb (never below `pack`) so the grid has
    # enough steps for double-buffering and v7x core sharding.
    col_steps = _cdiv(H, th)
    row_steps = _cdiv(B, tb)
    if row_steps * col_steps < _MIN_GRID_STEPS and B > pack:
        want_rows = _cdiv(_MIN_GRID_STEPS, col_steps)
        tb_small = _round_up(max(1, _cdiv(B, want_rows)), pack)
        tb = min(tb, max(pack, tb_small))
        tb = min(tb, B)

    return tb, th


def _prelu_2d(x2, a_row):
    """x2: [B, H]; a_row: [H] -> [B, H] in x2.dtype."""
    B, H = x2.shape
    dtype = x2.dtype
    itemsize = dtype.itemsize
    a2 = a_row.reshape(1, H).astype(dtype)     # compute in x's dtype (bf16 VALU on v6e/v7x)

    tb, th = _choose_tiles(B, H, itemsize)
    grid = (pl.cdiv(B, tb), pl.cdiv(H, th))

    # VMEM ceiling derived from actual live blocks: x + out double-buffered,
    # alpha double-buffered, plus compiler-scratch headroom.  Clamped so it is
    # always safe on v7x (64 MiB/TC) yet never below the useful default.
    block_bytes = tb * th * itemsize
    a_block_bytes = max(th, 128) * itemsize
    vmem_limit = 4 * block_bytes + 2 * a_block_bytes + (4 << 20)
    vmem_limit = int(min(max(vmem_limit, 16 << 20), 40 << 20))

    cost = pl.CostEstimate(
        flops=2 * B * H,
        transcendentals=0,
        bytes_accessed=2 * B * H * itemsize + H * itemsize,
    )

    return pl.pallas_call(
        _prelu_kernel,
        out_shape=jax.ShapeDtypeStruct((B, H), dtype),
        grid=grid,
        in_specs=[
            pl.BlockSpec((tb, th), lambda i, j: (i, j)),   # x tile marches over rows/cols
            pl.BlockSpec((1, th), lambda i, j: (0, j)),    # alpha: only the matching column tile
        ],
        out_specs=pl.BlockSpec((tb, th), lambda i, j: (i, j)),
        compiler_params=pltpu.CompilerParams(
            dimension_semantics=("parallel", "parallel"),  # megacore-shardable on v7x
            vmem_limit_bytes=vmem_limit,
        ),
        cost_estimate=cost,
    )(x2, a2)


def prelu(x, alpha):
    """PReLU forward. x: [..., H]; alpha: [H] or [1] (shared scalar slope).

    Note: alpha broadcasts against x's LAST dimension, matching this module's
    `alpha * torch.min(zeros, x)` (not nn.PReLU's channel-dim convention for
    >= 3-D inputs).
    """
    orig_shape = x.shape
    H = orig_shape[-1] if len(orig_shape) >= 1 else 1
    B = math.prod(orig_shape[:-1]) if len(orig_shape) > 1 else 1

    a = jnp.asarray(alpha, jnp.float32).reshape(-1)
    if a.shape[0] == 1 and H != 1:
        a = jnp.broadcast_to(a, (H,))        # PyTorch default num_parameters=1 case
    elif a.shape[0] != H:
        raise ValueError(
            f"alpha has {a.shape[0]} parameters but x's last dim is {H}")

    x2 = x.reshape(B, H)                     # collapsing leading dims is layout-free
    out2 = _prelu_2d(x2, a)
    return out2.reshape(orig_shape)


if __name__ == "__main__":
    key = jax.random.PRNGKey(0)
    k_x, k_a, k_x2 = jax.random.split(key, 3)

    # Shapes consistent with the DIN usage: [batch, hidden], num_parameters=hidden.
    batch, hidden = 8, 32

    x = jax.random.normal(k_x, (batch, hidden), dtype=jnp.float32)
    # Non-trivial per-feature slopes so the negative branch is actually tested.
    alpha = 0.25 + 0.1 * jax.random.normal(k_a, (hidden,), dtype=jnp.float32)

    out = jax.block_until_ready(prelu(x, alpha))
    ref = jnp.maximum(0.0, x) + alpha[None, :] * jnp.minimum(0.0, x)
    assert out.shape == x.shape and out.dtype == x.dtype
    assert jnp.allclose(out, ref, atol=1e-6), "per-feature alpha mismatch"

    # PyTorch default constructor case: num_parameters=1, init=1.0 (shared scalar).
    x2 = jax.random.normal(k_x2, (batch, hidden), dtype=jnp.float32)
    alpha_scalar = jnp.full((1,), 1.0, dtype=jnp.float32)
    out2 = jax.block_until_ready(prelu(x2, alpha_scalar))
    ref2 = jnp.maximum(0.0, x2) + 1.0 * jnp.minimum(0.0, x2)
    assert jnp.allclose(out2, ref2, atol=1e-6), "scalar alpha mismatch"

    # Larger bf16 case exercising the min-grid-steps path (multi-step row grid)
    # and the in-dtype (bf16) compute path.
    xb = jax.random.normal(k_x, (512, 256), dtype=jnp.bfloat16)
    ab = 0.1 + 0.05 * jax.random.normal(k_a, (256,), dtype=jnp.float32)
    outb = jax.block_until_ready(prelu(xb, ab))
    refb = jnp.where(xb > 0, xb, ab.astype(jnp.bfloat16)[None, :] * xb)
    assert outb.shape == xb.shape and outb.dtype == xb.dtype
    assert jnp.allclose(outb.astype(jnp.float32), refb.astype(jnp.float32),
                        atol=1e-2), "bf16 multi-tile mismatch"

    print("KERNEL_OK")
</pallas_src>

<mosaic_0001>
module attributes {stable_mosaic.version = 11 : i64} {
  func.func @_prelu_kernel(%arg0: i32, %arg1: i32, %arg2: memref<8x32xf32, #tpu.memory_space<vmem>>, %arg3: memref<1x32xf32, #tpu.memory_space<vmem>>, %arg4: memref<8x32xf32, #tpu.memory_space<vmem>>) attributes {dimension_semantics = [#tpu.dimension_semantics<parallel>, #tpu.dimension_semantics<parallel>], iteration_bounds = array<i64: 1, 1>, scalar_prefetch = 0 : i64, scratch_operands = 0 : i64, tpu.core_type = #tpu.core_type<tc>, window_params = [{transform_indices = @transform_0, window_bounds = array<i64: 8, 32>}, {transform_indices = @transform_1, window_bounds = array<i64: 1, 32>}, {transform_indices = @transform_2, window_bounds = array<i64: 8, 32>}]} {
    %c0 = arith.constant 0 : index
    %c0_0 = arith.constant 0 : index
    %0 = vector.load %arg2[%c0, %c0_0] : memref<8x32xf32, #tpu.memory_space<vmem>>, vector<8x32xf32>
    %c0_1 = arith.constant 0 : index
    %c0_2 = arith.constant 0 : index
    %1 = vector.load %arg3[%c0_1, %c0_2] : memref<1x32xf32, #tpu.memory_space<vmem>>, vector<1x32xf32>
    %cst = arith.constant 0.000000e+00 : f32
    %2 = vector.broadcast %cst : f32 to vector<8x32xf32>
    %3 = arith.cmpf ogt, %0, %2 : vector<8x32xf32>
    %4 = vector.broadcast %1 : vector<1x32xf32> to vector<8x32xf32>
    %5 = arith.mulf %4, %0 : vector<8x32xf32>
    %6 = arith.select %3, %0, %5 : vector<8x32xi1>, vector<8x32xf32>
    %c0_3 = arith.constant 0 : index
    %c0_4 = arith.constant 0 : index
    %7 = vector.load %arg4[%c0_3, %c0_4] : memref<8x32xf32, #tpu.memory_space<vmem>>, vector<8x32xf32>
    tpu.vector_store %arg4[%c0_3, %c0_4], %6 {strides = array<i32>} : memref<8x32xf32, #tpu.memory_space<vmem>>, vector<8x32xf32>,
    return
  }
  func.func @transform_0(%arg0: i32, %arg1: i32) -> (i32, i32) {
    %c0_i32 = arith.constant 0 : i32
    return %arg0, %arg1 : i32, i32
  }
  func.func @transform_1(%arg0: i32, %arg1: i32) -> (i32, i32) {
    %c0_i32 = arith.constant 0 : i32
    %c0_i32_0 = arith.constant 0 : i32
    return %c0_i32, %arg1 : i32, i32
  }
  func.func @transform_2(%arg0: i32, %arg1: i32) -> (i32, i32) {
    %c0_i32 = arith.constant 0 : i32
    return %arg0, %arg1 : i32, i32
  }
}

</mosaic_0001>

<llo_original>
// kernel: tpu_custom_call.1
$region0: #{tpu_custom_call.1}
  #allocation0 [shape = 'u32[]', space=smem, size = 0x4, offset = 0x4, fixed_abs, tag = 'smem constant byte address 0x4 - core index']
  #allocation1 [shape = 'u32[144,128]{1,0:T(1,128)}', space=vmem, size = 0x12000, scoped, tag = 'internal scratch']
  %s0 = inlined_call_operand.hbm [shape: f32[8,32], index: 0, kind: input, shape index: {}]
  %s1 = inlined_call_operand.vmem [shape: f32[1,32], index: 1, kind: input, shape index: {}]
  %s2 = inlined_call_operand.hbm [shape: f32[8,32], index: 2, kind: output, shape index: {}]
  %s3 = sld [smem:[#allocation0]]
  $region22: #{tpu_custom_call.1} parent=0
    _
  %s5 = ssub.s32 1, %s3
  %s6 = scalar_select 0, %s5, %s3
  $region1: #{tpu_custom_call.1} parent=0
    #allocation2 [shape = 'u8[4096]{0}', space=vmem, size = 0x1000, scoped, tag = 'input window, operand 0, single buffered']
    #allocation3 [shape = 's32[1]{0}', space=sflag, size = 0x4, scoped, tag = 'scoped memory for tpu_custom_call.1']
    #allocation4 [shape = 's32[1]{0}', space=sflag, size = 0x4, scoped, tag = 'scoped memory for tpu_custom_call.1']
    #allocation5 [shape = 'u8[4096]{0}', space=vmem, size = 0x1000, scoped, tag = 'output window, operand 0, single buffered']
    %7 = vsyncpa [#allocation3], 0
    %8 = vsyncpa [#allocation4], 0
    // Predicated region
    $region2: #{tpu_custom_call.1} parent=1 // pred_check
      _
    $region3: #{tpu_custom_call.1} parent=1 // pred_check_branch
      %10 = sbr.rel (0) target = $region5
    $region4: #{tpu_custom_call.1} parent=1 // pred_region
      %s12 = ssub.s32 128, 128
      %13 = vsyncadd [#allocation3], %s12
      %s15 = sshll.u32 [#allocation2], 4
      %s16 = int_to_ptr.vmem [resolvable:$true] %s15
      %18 = dma.hbm_to_vmem [thread:$0]  %s0, 128, %s16, [#allocation3]
    $region5: #{tpu_custom_call.1} parent=1 // pred_fallthru
      _
    // Predicated region
    $region6: #{tpu_custom_call.1} parent=1 // pred_check
      _
    $region7: #{tpu_custom_call.1} parent=1 // pred_check_branch
      %20 = sbr.rel (0) target = $region9
    $region8: #{tpu_custom_call.1} parent=1 // pred_region
      _
    $region9: #{tpu_custom_call.1} parent=1 // pred_fallthru
      _
    // Predicated region
    $region10: #{tpu_custom_call.1} parent=1 // pred_check
      _
    $region11: #{tpu_custom_call.1} parent=1 // pred_check_branch
      %22 = sbr.rel (0) target = $region13
    $region12: #{tpu_custom_call.1} parent=1 // pred_region
      %23 = dma.done [#allocation3], 128
    $region13: #{tpu_custom_call.1} parent=1 // pred_fallthru
      _
    %v24 = vld [vmem:[#allocation2] sm:$0xff]
    %v25 = vld [vmem:[%s1] sm:$0x1]
    %vm26 = vcmp.gt.f32.partialorder %v24, 0.0
    %v28 = vlaneseq
    %v29 = vshrl.u32 %v28, 7
    %v30 = vsub.s32 0, %v29
    %v31 = vrot.slane %v25, %v30
    %v33 = vmul.f32 %v31, %v24
    %v34 = vsel %vm26, %v24, %v33
    %vm35 = vcmask 261120
    %36 = vst.msk [vmem:[#allocation5] sm:$0xff] %vm35, %v34
    // Predicated region
    $region14: #{tpu_custom_call.1} parent=1 // pred_check
      _
    $region15: #{tpu_custom_call.1} parent=1 // pred_check_branch
      %38 = sbr.rel (0) target = $region17
    $region16: #{tpu_custom_call.1} parent=1 // pred_region
      %s40 = ssub.s32 128, 128
      %41 = vsyncadd [#allocation4], %s40
      %s43 = sshll.u32 [#allocation5], 4
      %s44 = int_to_ptr.vmem [resolvable:$true] %s43
      %46 = dma.vmem_to_hbm [thread:$0]  %s44, 128, %s2, [#allocation4]
    $region17: #{tpu_custom_call.1} parent=1 // pred_fallthru
      _
    // Predicated region
    $region18: #{tpu_custom_call.1} parent=1 // pred_check
      _
    $region19: #{tpu_custom_call.1} parent=1 // pred_check_branch
      %48 = sbr.rel (0) target = $region21
    $region20: #{tpu_custom_call.1} parent=1 // pred_region
      %49 = dma.done [#allocation4], 128
    $region21: #{tpu_custom_call.1} parent=1 // pred_fallthru
      _
    %50 = vsyncpa [#allocation3], 1
    %51 = vsyncpa [#allocation4], 1

</llo_original>
